<compile_context>
chip_gen: v7x
topology: tpu7x:2x2x1
jax: 0.10.0
libtpu: 0.0.40
codegen_flags: <defaults>
</compile_context>

<pallas_src>
import functools

import jax
import jax.numpy as jnp
from jax.experimental import pallas as pl
from jax.experimental.pallas import tpu as pltpu

IN_CHANS = 3
N_CLASSES = 1
POOL_SIZE = 2          # Maxout pool_size
NUM_FEATURES = 32      # synthetic backbone num_features

_OUT = N_CLASSES * POOL_SIZE
_OUT_PAD = 128         # lane-dense head-output width
_LANE = 128


def _round_up(x, m):
    return ((x + m - 1) // m) * m


def _isic_kernel(p_ref, wc_ref, bc_ref, wf_ref, bf_ref, out_ref, *, bt, hw, dot_dtype):
    """One grid step == one batch tile of `bt` images.

    p_ref  : (bt, hw, K_pad)      im2col patches (zero-padded K dim)
    wc_ref : (K_pad, F_pad)       conv stem weights in matmul layout
    bc_ref : (1, F_pad)           conv stem bias
    wf_ref : (F_pad, OUT_PAD)     Maxout linear weight (in, out*pool), lane-padded
    bf_ref : (1, OUT_PAD)         Maxout linear bias, lane-padded
    out_ref: (bt, OUT_PAD)        pre-max Maxout logits (lane-dense slab)
    """
    k_pad = p_ref.shape[-1]
    f_pad = wc_ref.shape[-1]

    # Single im2col matmul on the MXU: (bt*hw, K) x (K, F).
    patches = p_ref[...].reshape(bt * hw, k_pad).astype(dot_dtype)
    acc = jnp.dot(patches, wc_ref[...].astype(dot_dtype),
                  preferred_element_type=jnp.float32)          # (bt*hw, F_pad) f32

    feat = jnp.maximum(acc + bc_ref[...], 0.0)                  # conv bias + ReLU

    # AdaptiveAvgPool2d((1,1)) + flatten -> per-image mean over H*W.
    pooled = jnp.mean(feat.reshape(bt, hw, f_pad), axis=1)      # (bt, F_pad)

    # Maxout head: Linear(F -> N_CLASSES*POOL_SIZE). Pool-max is done in the wrapper
    # so the store stays lane-dense.
    z = jnp.dot(pooled.astype(dot_dtype), wf_ref[...].astype(dot_dtype),
                preferred_element_type=jnp.float32) + bf_ref[...]   # (bt, OUT_PAD)

    out_ref[...] = z.astype(out_ref.dtype)


def _choose_batch_tile(batch, batch_tile):
    bt = min(batch_tile, batch)
    if bt < batch:
        # Multiple tiles -> output block's second-to-last dim must be a multiple of 8.
        bt = max(8, (bt // 8) * 8)
    b_pad = _round_up(batch, bt)
    return bt, b_pad


def isic_forward(x_nchw, params, *, batch_tile=32, matmul_dtype=jnp.float32):
    """Forward pass. x_nchw: (B, C, H, W) float32 (PyTorch layout).

    `matmul_dtype=jnp.bfloat16` is recommended on v6e/v7x at real backbone sizes
    (f32 accumulation kept via preferred_element_type).
    """
    wc, bc, wf, bf = params
    B, C, H, W = x_nchw.shape
    F = wc.shape[-1]
    HW = H * W
    K = 9 * C

    K_pad = _round_up(K, 8)
    F_pad = _round_up(max(F, _LANE), _LANE)
    Bt, B_pad = _choose_batch_tile(B, batch_tile)
    n_tiles = B_pad // Bt

    # ---- Weight / bias repacking (matmul layout, lane-padded) in plain JAX glue ----
    wc2 = wc.reshape(K, F).astype(jnp.float32)                      # (dh,dw,c) major->minor
    wc_p = jnp.zeros((K_pad, F_pad), jnp.float32).at[:K, :F].set(wc2)
    bc_p = jnp.zeros((1, F_pad), jnp.float32).at[:, :F].set(bc.reshape(1, F))
    wf_p = jnp.zeros((F_pad, _OUT_PAD), jnp.float32).at[:F, :_OUT].set(wf.astype(jnp.float32))
    bf_p = jnp.zeros((1, _OUT_PAD), jnp.float32).at[:, :_OUT].set(bf.reshape(1, _OUT))

    # ---- im2col in the wrapper: NCHW -> NHWC -> (B, H*W, 9*C), ordering (dh, dw, c) ----
    x = jnp.transpose(x_nchw, (0, 2, 3, 1)).astype(jnp.float32)
    x_padded = jnp.pad(x, ((0, 0), (1, 1), (1, 1), (0, 0)))          # conv padding=1
    cols = [x_padded[:, dh:dh + H, dw:dw + W, :] for dh in range(3) for dw in range(3)]
    patches = jnp.stack(cols, axis=3).reshape(B, HW, K)
    patches = jnp.pad(patches, ((0, B_pad - B), (0, 0), (0, K_pad - K)))

    kernel = functools.partial(_isic_kernel, bt=Bt, hw=HW, dot_dtype=matmul_dtype)

    grid_spec = pltpu.PrefetchScalarGridSpec(
        num_scalar_prefetch=0,
        grid=(n_tiles,),
        in_specs=[
            pl.BlockSpec((Bt, HW, K_pad), lambda b: (b, 0, 0)),
            pl.BlockSpec((K_pad, F_pad), lambda b: (0, 0)),
            pl.BlockSpec((1, F_pad), lambda b: (0, 0)),
            pl.BlockSpec((F_pad, _OUT_PAD), lambda b: (0, 0)),
            pl.BlockSpec((1, _OUT_PAD), lambda b: (0, 0)),
        ],
        # Per-grid-step, lane-dense output block -> batch axis is truly parallel (megacore).
        out_specs=pl.BlockSpec((Bt, _OUT_PAD), lambda b: (b, 0)),
    )

    logits_padded = pl.pallas_call(
        kernel,
        out_shape=jax.ShapeDtypeStruct((B_pad, _OUT_PAD), jnp.float32),
        grid_spec=grid_spec,
        compiler_params=pltpu.CompilerParams(
            dimension_semantics=("parallel",)),
    )(patches, wc_p, bc_p, wf_p, bf_p)

    # Maxout pool-max on the pre-max logits (wrapper side, keeps kernel store lane-dense).
    z = logits_padded[:B, :_OUT].reshape(B, N_CLASSES, POOL_SIZE)
    return jnp.max(z, axis=2)                                        # (B, N_CLASSES)


def init_params(key, in_c=IN_CHANS, num_features=NUM_FEATURES,
                n_classes=N_CLASSES, pool_size=POOL_SIZE):
    k1, k2, k3, k4 = jax.random.split(key, 4)
    wc = 0.1 * jax.random.normal(k1, (3, 3, in_c, num_features), jnp.float32)
    bc = 0.1 * jax.random.normal(k2, (1, num_features), jnp.float32)
    # Stored as (in_features, out_features*pool) == transposed nn.Linear weight.
    wf = 0.1 * jax.random.normal(k3, (num_features, n_classes * pool_size), jnp.float32)
    bf = 0.1 * jax.random.normal(k4, (1, n_classes * pool_size), jnp.float32)
    return wc, bc, wf, bf


if __name__ == "__main__":
    key = jax.random.PRNGKey(0)
    kx, kp = jax.random.split(key)

    B, C, H, W = 2, IN_CHANS, 16, 16
    x = jax.random.normal(kx, (B, C, H, W), jnp.float32)
    params = init_params(kp)

    out = isic_forward(x, params)
    out = jax.block_until_ready(out)
    assert out.shape == (B, N_CLASSES), out.shape
    print("KERNEL_OK")
</pallas_src>

<mosaic_0001>
module attributes {stable_mosaic.version = 11 : i64} {
  func.func @_isic_kernel(%arg0: i32, %arg1: memref<2x256x32xf32, #tpu.memory_space<vmem>>, %arg2: memref<32x128xf32, #tpu.memory_space<vmem>>, %arg3: memref<1x128xf32, #tpu.memory_space<vmem>>, %arg4: memref<128x128xf32, #tpu.memory_space<vmem>>, %arg5: memref<1x128xf32, #tpu.memory_space<vmem>>, %arg6: memref<2x128xf32, #tpu.memory_space<vmem>>) attributes {dimension_semantics = [#tpu.dimension_semantics<parallel>], iteration_bounds = array<i64: 1>, scalar_prefetch = 0 : i64, scratch_operands = 0 : i64, tpu.core_type = #tpu.core_type<tc>, window_params = [{transform_indices = @transform_0, window_bounds = array<i64: 2, 256, 32>}, {pipeline_mode = #tpu.pipeline_mode<synchronous>, transform_indices = @transform_1, window_bounds = array<i64: 32, 128>}, {pipeline_mode = #tpu.pipeline_mode<synchronous>, transform_indices = @transform_2, window_bounds = array<i64: 1, 128>}, {pipeline_mode = #tpu.pipeline_mode<synchronous>, transform_indices = @transform_3, window_bounds = array<i64: 128, 128>}, {pipeline_mode = #tpu.pipeline_mode<synchronous>, transform_indices = @transform_4, window_bounds = array<i64: 1, 128>}, {transform_indices = @transform_5, window_bounds = array<i64: 2, 128>}]} {
    %c0 = arith.constant 0 : index
    %c0_0 = arith.constant 0 : index
    %c0_1 = arith.constant 0 : index
    %0 = vector.load %arg1[%c0, %c0_0, %c0_1] : memref<2x256x32xf32, #tpu.memory_space<vmem>>, vector<2x256x32xf32>
    %1 = vector.shape_cast %0 : vector<2x256x32xf32> to vector<512x32xf32>
    %c0_2 = arith.constant 0 : index
    %c0_3 = arith.constant 0 : index
    %2 = vector.load %arg2[%c0_2, %c0_3] : memref<32x128xf32, #tpu.memory_space<vmem>>, vector<32x128xf32>
    %cst = arith.constant dense<0.000000e+00> : vector<512x128xf32>
    %3 = tpu.matmul %1, %2, %cst {dimension_numbers = #tpu.dot_dimension_numbers<[1], [0], [0], [1], [0, 0, 1, 1], [], []>} : vector<512x32xf32>, vector<32x128xf32>, vector<512x128xf32> -> vector<512x128xf32>
    %c0_4 = arith.constant 0 : index
    %c0_5 = arith.constant 0 : index
    %4 = vector.load %arg3[%c0_4, %c0_5] : memref<1x128xf32, #tpu.memory_space<vmem>>, vector<1x128xf32>
    %5 = vector.broadcast %4 : vector<1x128xf32> to vector<512x128xf32>
    %6 = arith.addf %3, %5 : vector<512x128xf32>
    %cst_6 = arith.constant 0.000000e+00 : f32
    %7 = vector.broadcast %cst_6 : f32 to vector<512x128xf32>
    %8 = arith.maximumf %6, %7 : vector<512x128xf32>
    %9 = vector.shape_cast %8 : vector<512x128xf32> to vector<2x256x128xf32>
    %cst_7 = arith.constant dense<0.000000e+00> : vector<2x128xf32>
    %10 = vector.multi_reduction <add>, %9, %cst_7 [1] : vector<2x256x128xf32> to vector<2x128xf32>
    %cst_8 = arith.constant 2.560000e+02 : f32
    %11 = vector.broadcast %cst_8 : f32 to vector<2x128xf32>
    %12 = arith.divf %10, %11 : vector<2x128xf32>
    %c0_9 = arith.constant 0 : index
    %c0_10 = arith.constant 0 : index
    %13 = vector.load %arg4[%c0_9, %c0_10] : memref<128x128xf32, #tpu.memory_space<vmem>>, vector<128x128xf32>
    %cst_11 = arith.constant dense<0.000000e+00> : vector<2x128xf32>
    %14 = tpu.matmul %12, %13, %cst_11 {dimension_numbers = #tpu.dot_dimension_numbers<[1], [0], [0], [1], [0, 0, 1, 1], [], []>} : vector<2x128xf32>, vector<128x128xf32>, vector<2x128xf32> -> vector<2x128xf32>
    %c0_12 = arith.constant 0 : index
    %c0_13 = arith.constant 0 : index
    %15 = vector.load %arg5[%c0_12, %c0_13] : memref<1x128xf32, #tpu.memory_space<vmem>>, vector<1x128xf32>
    %16 = vector.broadcast %15 : vector<1x128xf32> to vector<2x128xf32>
    %17 = arith.addf %14, %16 : vector<2x128xf32>
    %c0_14 = arith.constant 0 : index
    %c0_15 = arith.constant 0 : index
    %18 = vector.load %arg6[%c0_14, %c0_15] : memref<2x128xf32, #tpu.memory_space<vmem>>, vector<2x128xf32>
    tpu.vector_store %arg6[%c0_14, %c0_15], %17 {strides = array<i32>} : memref<2x128xf32, #tpu.memory_space<vmem>>, vector<2x128xf32>,
    return
  }
  func.func @transform_0(%arg0: i32) -> (i32, i32, i32) {
    %c0_i32 = arith.constant 0 : i32
    %c0_i32_0 = arith.constant 0 : i32
    %c0_i32_1 = arith.constant 0 : i32
    return %arg0, %c0_i32, %c0_i32_0 : i32, i32, i32
  }
  func.func @transform_1(%arg0: i32) -> (i32, i32) {
    %c0_i32 = arith.constant 0 : i32
    %c0_i32_0 = arith.constant 0 : i32
    %c0_i32_1 = arith.constant 0 : i32
    return %c0_i32, %c0_i32_0 : i32, i32
  }
  func.func @transform_2(%arg0: i32) -> (i32, i32) {
    %c0_i32 = arith.constant 0 : i32
    %c0_i32_0 = arith.constant 0 : i32
    %c0_i32_1 = arith.constant 0 : i32
    return %c0_i32, %c0_i32_0 : i32, i32
  }
  func.func @transform_3(%arg0: i32) -> (i32, i32) {
    %c0_i32 = arith.constant 0 : i32
    %c0_i32_0 = arith.constant 0 : i32
    %c0_i32_1 = arith.constant 0 : i32
    return %c0_i32, %c0_i32_0 : i32, i32
  }
  func.func @transform_4(%arg0: i32) -> (i32, i32) {
    %c0_i32 = arith.constant 0 : i32
    %c0_i32_0 = arith.constant 0 : i32
    %c0_i32_1 = arith.constant 0 : i32
    return %c0_i32, %c0_i32_0 : i32, i32
  }
  func.func @transform_5(%arg0: i32) -> (i32, i32) {
    %c0_i32 = arith.constant 0 : i32
    %c0_i32_0 = arith.constant 0 : i32
    return %arg0, %c0_i32 : i32, i32
  }
}

</mosaic_0001>

<llo_original>
// kernel: tpu_custom_call.1
$region0: #{tpu_custom_call.1}
  #allocation0 [shape = 'u32[]', space=smem, size = 0x4, offset = 0x4, fixed_abs, tag = 'smem constant byte address 0x4 - core index']
  #allocation1 [shape = 'u32[144,128]{1,0:T(1,128)}', space=vmem, size = 0x12000, scoped, tag = 'internal scratch']
  %s0 = inlined_call_operand.vmem [shape: f32[2,256,32], index: 0, kind: input, shape index: {}]
  %s1 = inlined_call_operand.vmem [shape: f32[32,128], index: 1, kind: input, shape index: {}]
  %s2 = inlined_call_operand.vmem [shape: f32[1,128], index: 2, kind: input, shape index: {}]
  %s3 = inlined_call_operand.vmem [shape: f32[128,128], index: 3, kind: input, shape index: {}]
  %s4 = inlined_call_operand.vmem [shape: f32[1,128], index: 4, kind: input, shape index: {}]
  %s5 = inlined_call_operand.hbm [shape: f32[2,128], index: 5, kind: output, shape index: {}]
  %s6 = sld [smem:[#allocation0]]
  $region30: #{tpu_custom_call.1} parent=0
    _
  %s8 = ssub.s32 1, %s6
  %s9 = scalar_select 0, %s8, %s6
  $region1: #{tpu_custom_call.1} parent=0
    #allocation2 [shape = 'u8[1024]{0}', space=vmem, size = 0x400, scoped, tag = 'output window, operand 0, single buffered']
    #allocation3 [shape = 's32[1]{0}', space=sflag, size = 0x4, scoped, tag = 'scoped memory for tpu_custom_call.1']
    %10 = vsyncpa [#allocation3], 0
    // Predicated region
    $region2: #{tpu_custom_call.1} parent=1 // pred_check
      _
    $region3: #{tpu_custom_call.1} parent=1 // pred_check_branch
      %12 = sbr.rel (0) target = $region5
    $region4: #{tpu_custom_call.1} parent=1 // pred_region
      _
    $region5: #{tpu_custom_call.1} parent=1 // pred_fallthru
      _
    // Predicated region
    $region6: #{tpu_custom_call.1} parent=1 // pred_check
      _
    $region7: #{tpu_custom_call.1} parent=1 // pred_check_branch
      %14 = sbr.rel (0) target = $region9
    $region8: #{tpu_custom_call.1} parent=1 // pred_region
      _
    $region9: #{tpu_custom_call.1} parent=1 // pred_fallthru
      _
    // Predicated region
    $region10: #{tpu_custom_call.1} parent=1 // pred_check
      _
    $region11: #{tpu_custom_call.1} parent=1 // pred_check_branch
      %16 = sbr.rel (0) target = $region13
    $region12: #{tpu_custom_call.1} parent=1 // pred_region
      _
    $region13: #{tpu_custom_call.1} parent=1 // pred_fallthru
      _
    // Predicated region
    $region14: #{tpu_custom_call.1} parent=1 // pred_check
      _
    $region15: #{tpu_custom_call.1} parent=1 // pred_check_branch
      %18 = sbr.rel (0) target = $region17
    $region16: #{tpu_custom_call.1} parent=1 // pred_region
      _
    $region17: #{tpu_custom_call.1} parent=1 // pred_fallthru
      _
    // Predicated region
    $region18: #{tpu_custom_call.1} parent=1 // pred_check
      _
    $region19: #{tpu_custom_call.1} parent=1 // pred_check_branch
      %20 = sbr.rel (0) target = $region21
    $region20: #{tpu_custom_call.1} parent=1 // pred_region
      _
    $region21: #{tpu_custom_call.1} parent=1 // pred_fallthru
      _
    %v21 = vld [vmem:[%s0] sm:$0xff]
    %v22 = vld [vmem:[%s0 + $0x8] sm:$0xff]
    %v23 = vld [vmem:[%s0 + $0x10] sm:$0xff]
    %v24 = vld [vmem:[%s0 + $0x18] sm:$0xff]
    %v25 = vld [vmem:[%s0 + $0x20] sm:$0xff]
    %v26 = vld [vmem:[%s0 + $0x28] sm:$0xff]
    %v27 = vld [vmem:[%s0 + $0x30] sm:$0xff]
    %v28 = vld [vmem:[%s0 + $0x38] sm:$0xff]
    %v29 = vld [vmem:[%s0 + $0x40] sm:$0xff]
    %v30 = vld [vmem:[%s0 + $0x48] sm:$0xff]
    %v31 = vld [vmem:[%s0 + $0x50] sm:$0xff]
    %v32 = vld [vmem:[%s0 + $0x58] sm:$0xff]
    %v33 = vld [vmem:[%s0 + $0x60] sm:$0xff]
    %v34 = vld [vmem:[%s0 + $0x68] sm:$0xff]
    %v35 = vld [vmem:[%s0 + $0x70] sm:$0xff]
    %v36 = vld [vmem:[%s0 + $0x78] sm:$0xff]
    %v37 = vld [vmem:[%s0 + $0x80] sm:$0xff]
    %v38 = vld [vmem:[%s0 + $0x88] sm:$0xff]
    %v39 = vld [vmem:[%s0 + $0x90] sm:$0xff]
    %v40 = vld [vmem:[%s0 + $0x98] sm:$0xff]
    %v41 = vld [vmem:[%s0 + $0xa0] sm:$0xff]
    %v42 = vld [vmem:[%s0 + $0xa8] sm:$0xff]
    %v43 = vld [vmem:[%s0 + $0xb0] sm:$0xff]
    %v44 = vld [vmem:[%s0 + $0xb8] sm:$0xff]
    %v45 = vld [vmem:[%s0 + $0xc0] sm:$0xff]
    %v46 = vld [vmem:[%s0 + $0xc8] sm:$0xff]
    %v47 = vld [vmem:[%s0 + $0xd0] sm:$0xff]
    %v48 = vld [vmem:[%s0 + $0xd8] sm:$0xff]
    %v49 = vld [vmem:[%s0 + $0xe0] sm:$0xff]
    %v50 = vld [vmem:[%s0 + $0xe8] sm:$0xff]
    %v51 = vld [vmem:[%s0 + $0xf0] sm:$0xff]
    %v52 = vld [vmem:[%s0 + $0xf8] sm:$0xff]
    %v53 = vld [vmem:[%s0 + $0x100] sm:$0xff]
    %v54 = vld [vmem:[%s0 + $0x108] sm:$0xff]
    %v55 = vld [vmem:[%s0 + $0x110] sm:$0xff]
    %v56 = vld [vmem:[%s0 + $0x118] sm:$0xff]
    %v57 = vld [vmem:[%s0 + $0x120] sm:$0xff]
    %v58 = vld [vmem:[%s0 + $0x128] sm:$0xff]
    %v59 = vld [vmem:[%s0 + $0x130] sm:$0xff]
    %v60 = vld [vmem:[%s0 + $0x138] sm:$0xff]
    %v61 = vld [vmem:[%s0 + $0x140] sm:$0xff]
    %v62 = vld [vmem:[%s0 + $0x148] sm:$0xff]
    %v63 = vld [vmem:[%s0 + $0x150] sm:$0xff]
    %v64 = vld [vmem:[%s0 + $0x158] sm:$0xff]
    %v65 = vld [vmem:[%s0 + $0x160] sm:$0xff]
    %v66 = vld [vmem:[%s0 + $0x168] sm:$0xff]
    %v67 = vld [vmem:[%s0 + $0x170] sm:$0xff]
    %v68 = vld [vmem:[%s0 + $0x178] sm:$0xff]
    %v69 = vld [vmem:[%s0 + $0x180] sm:$0xff]
    %v70 = vld [vmem:[%s0 + $0x188] sm:$0xff]
    %v71 = vld [vmem:[%s0 + $0x190] sm:$0xff]
    %v72 = vld [vmem:[%s0 + $0x198] sm:$0xff]
    %v73 = vld [vmem:[%s0 + $0x1a0] sm:$0xff]
    %v74 = vld [vmem:[%s0 + $0x1a8] sm:$0xff]
    %v75 = vld [vmem:[%s0 + $0x1b0] sm:$0xff]
    %v76 = vld [vmem:[%s0 + $0x1b8] sm:$0xff]
    %v77 = vld [vmem:[%s0 + $0x1c0] sm:$0xff]
    %v78 = vld [vmem:[%s0 + $0x1c8] sm:$0xff]
    %v79 = vld [vmem:[%s0 + $0x1d0] sm:$0xff]
    %v80 = vld [vmem:[%s0 + $0x1d8] sm:$0xff]
    %v81 = vld [vmem:[%s0 + $0x1e0] sm:$0xff]
    %v82 = vld [vmem:[%s0 + $0x1e8] sm:$0xff]
    %v83 = vld [vmem:[%s0 + $0x1f0] sm:$0xff]
    %v84 = vld [vmem:[%s0 + $0x1f8] sm:$0xff]
    %v85 = vld [vmem:[%s1] sm:$0xff]
    %v86 = vld [vmem:[%s1 + $0x8] sm:$0xff]
    %v87 = vld [vmem:[%s1 + $0x10] sm:$0xff]
    %v88 = vld [vmem:[%s1 + $0x18] sm:$0xff]
    %v89 = vld [vmem:[%s2] sm:$0x1]
    %v91 = vlaneseq
    %v92 = vshrl.u32 %v91, 7
    %v93 = vsub.s32 0, %v92
    %v94 = vrot.slane %v89, %v93
    %vm96 = vcmask 261120
    %v98 = vsel %vm96, %v21, 0
    %v101 = vsel %vm96, %v22, 0
    %v104 = vsel %vm96, %v23, 0
    %v107 = vsel %vm96, %v24, 0
    %v110 = vsel %vm96, %v25, 0
    %v113 = vsel %vm96, %v26, 0
    %v116 = vsel %vm96, %v27, 0
    %v119 = vsel %vm96, %v28, 0
    %v122 = vsel %vm96, %v29, 0
    %v125 = vsel %vm96, %v30, 0
    %v128 = vsel %vm96, %v31, 0
    %v131 = vsel %vm96, %v32, 0
    %v134 = vsel %vm96, %v33, 0
    %v137 = vsel %vm96, %v34, 0
    %v140 = vsel %vm96, %v35, 0
    %v143 = vsel %vm96, %v36, 0
    %v146 = vsel %vm96, %v37, 0
    %v149 = vsel %vm96, %v38, 0
    %v152 = vsel %vm96, %v39, 0
    %v155 = vsel %vm96, %v40, 0
    %v158 = vsel %vm96, %v41, 0
    %v161 = vsel %vm96, %v42, 0
    %v164 = vsel %vm96, %v43, 0
    %v167 = vsel %vm96, %v44, 0
    %v170 = vsel %vm96, %v45, 0
    %v173 = vsel %vm96, %v46, 0
    %v176 = vsel %vm96, %v47, 0
    %v179 = vsel %vm96, %v48, 0
    %v182 = vsel %vm96, %v49, 0
    %v185 = vsel %vm96, %v50, 0
    %v188 = vsel %vm96, %v51, 0
    %v191 = vsel %vm96, %v52, 0
    %v194 = vsel %vm96, %v53, 0
    %v197 = vsel %vm96, %v54, 0
    %v200 = vsel %vm96, %v55, 0
    %v203 = vsel %vm96, %v56, 0
    %v206 = vsel %vm96, %v57, 0
    %v209 = vsel %vm96, %v58, 0
    %v212 = vsel %vm96, %v59, 0
    %v215 = vsel %vm96, %v60, 0
    %v218 = vsel %vm96, %v61, 0
    %v221 = vsel %vm96, %v62, 0
    %v224 = vsel %vm96, %v63, 0
    %v227 = vsel %vm96, %v64, 0
    %v230 = vsel %vm96, %v65, 0
    %v233 = vsel %vm96, %v66, 0
    %v236 = vsel %vm96, %v67, 0
    %v239 = vsel %vm96, %v68, 0
    %v242 = vsel %vm96, %v69, 0
    %v245 = vsel %vm96, %v70, 0
    %v248 = vsel %vm96, %v71, 0
    %v251 = vsel %vm96, %v72, 0
    %v254 = vsel %vm96, %v73, 0
    %v257 = vsel %vm96, %v74, 0
    %v260 = vsel %vm96, %v75, 0
    %v263 = vsel %vm96, %v76, 0
    %v266 = vsel %vm96, %v77, 0
    %v269 = vsel %vm96, %v78, 0
    %v272 = vsel %vm96, %v79, 0
    %v275 = vsel %vm96, %v80, 0
    %v278 = vsel %vm96, %v81, 0
    %v281 = vsel %vm96, %v82, 0
    %v284 = vsel %vm96, %v83, 0
    %v287 = vsel %vm96, %v84, 0
    %289 = vmatprep.subr.mxu0 0.0
    %290 = vmatpush1.msra.mxu0 %v85
    %291 = vmatprep.subr.mxu0 0.0
    %292 = vmatpush1.msra.mxu0 %v86
    %293 = vmatprep.subr.mxu0 0.0
    %294 = vmatpush1.msra.mxu0 %v87
    %295 = vmatprep.subr.mxu0 0.0
    %296 = vmatpush1.msra.mxu0 %v88
    %297 = vmatprep.subr.mxu0 0.0
    %298 = vmatpush1.msra.mxu0 0.0
    %299 = vmatprep.subr.mxu0 0.0
    %300 = vmatpush1.msra.mxu0 0.0
    %301 = vmatprep.subr.mxu0 0.0
    %302 = vmatpush1.msra.mxu0 0.0
    %303 = vmatprep.subr.mxu0 0.0
    %304 = vmatpush1.msra.mxu0 0.0
    %305 = vmatprep.subr.mxu0 0.0
    %306 = vmatpush1.msra.mxu0 0.0
    %307 = vmatprep.subr.mxu0 0.0
    %308 = vmatpush1.msra.mxu0 0.0
    %309 = vmatprep.subr.mxu0 0.0
    %310 = vmatpush1.msra.mxu0 0.0
    %311 = vmatprep.subr.mxu0 0.0
    %312 = vmatpush1.msra.mxu0 0.0
    %313 = vmatprep.subr.mxu0 0.0
    %314 = vmatpush1.msra.mxu0 0.0
    %315 = vmatprep.subr.mxu0 0.0
    %316 = vmatpush1.msra.mxu0 0.0
    %317 = vmatprep.subr.mxu0 0.0
    %318 = vmatpush1.msra.mxu0 0.0
    %319 = vmatprep.subr.mxu0 0.0
    %320 = vmatpush1.msra.mxu0 0.0
    %321 = vmatprep.subr.mxu0 0.0
    %322 = vmatpush1.msra.mxu0 0.0
    %323 = vmatprep.subr.mxu0 0.0
    %324 = vmatpush1.msra.mxu0 0.0
    %325 = vmatprep.subr.mxu0 0.0
    %326 = vmatpush1.msra.mxu0 0.0
    %327 = vmatprep.subr.mxu0 0.0
    %328 = vmatpush1.msra.mxu0 0.0
    %329 = vmatprep.subr.mxu0 0.0
    %330 = vmatpush1.msra.mxu0 0.0
    %331 = vmatprep.subr.mxu0 0.0
    %332 = vmatpush1.msra.mxu0 0.0
    %333 = vmatprep.subr.mxu0 0.0
    %334 = vmatpush1.msra.mxu0 0.0
    %335 = vmatprep.subr.mxu0 0.0
    %336 = vmatpush1.msra.mxu0 0.0
    %337 = vmatprep.subr.mxu0 0.0
    %338 = vmatpush1.msra.mxu0 0.0
    %339 = vmatprep.subr.mxu0 0.0
    %340 = vmatpush1.msra.mxu0 0.0
    %341 = vmatprep.subr.mxu0 0.0
    %342 = vmatpush1.msra.mxu0 0.0
    %343 = vmatprep.subr.mxu0 0.0
    %344 = vmatpush1.msra.mxu0 0.0
    %345 = vmatprep.subr.mxu0 0.0
    %346 = vmatpush1.msra.mxu0 0.0
    %347 = vmatprep.subr.mxu0 0.0
    %348 = vmatpush1.msra.mxu0 0.0
    %349 = vmatprep.subr.mxu0 0.0
    %350 = vmatpush1.msra.mxu0 0.0
    %351 = vmatprep.subr.mxu0 0.0
    %352 = vmatpush1.msra.mxu0 0.0
    %353 = vmatprep.mubr.f32.mxu0 0.0
    %354 = vmatmul.mubr.f32.gmra.mrb[0].mxu0 %v98
    %v355 = vpop.f32.mrb[0].mxu0
    %v356 = vadd.f32 %v94, %v355
    %v357 = vpop.f32.mrb[0].mxu0
    %358 = vmatprep.mubr.f32.mxu0 0.0
    %359 = vmatmul.mubr.f32.gmra.mrb[0].mxu0 %v101
    %v360 = vpop.f32.mrb[0].mxu0
    %v361 = vadd.f32 %v94, %v360
    %v362 = vpop.f32.mrb[0].mxu0
    %363 = vmatprep.mubr.f32.mxu0 0.0
    %364 = vmatmul.mubr.f32.gmra.mrb[0].mxu0 %v104
    %v365 = vpop.f32.mrb[0].mxu0
    %v366 = vadd.f32 %v94, %v365
    %v367 = vpop.f32.mrb[0].mxu0
    %368 = vmatprep.mubr.f32.mxu0 0.0
    %369 = vmatmul.mubr.f32.gmra.mrb[0].mxu0 %v107
    %v370 = vpop.f32.mrb[0].mxu0
    %v371 = vadd.f32 %v94, %v370
    %v372 = vpop.f32.mrb[0].mxu0
    %373 = vmatprep.mubr.f32.mxu0 0.0
    %374 = vmatmul.mubr.f32.gmra.mrb[0].mxu0 %v110
    %v375 = vpop.f32.mrb[0].mxu0
    %v376 = vadd.f32 %v94, %v375
    %v377 = vpop.f32.mrb[0].mxu0
    %378 = vmatprep.mubr.f32.mxu0 0.0
    %379 = vmatmul.mubr.f32.gmra.mrb[0].mxu0 %v113
    %v380 = vpop.f32.mrb[0].mxu0
    %v381 = vadd.f32 %v94, %v380
    %v382 = vpop.f32.mrb[0].mxu0
    %383 = vmatprep.mubr.f32.mxu0 0.0
    %384 = vmatmul.mubr.f32.gmra.mrb[0].mxu0 %v116
    %v385 = vpop.f32.mrb[0].mxu0
    %v386 = vadd.f32 %v94, %v385
    %v387 = vpop.f32.mrb[0].mxu0
    %388 = vmatprep.mubr.f32.mxu0 0.0
    %389 = vmatmul.mubr.f32.gmra.mrb[0].mxu0 %v119
    %v390 = vpop.f32.mrb[0].mxu0
    %v391 = vadd.f32 %v94, %v390
    %v392 = vpop.f32.mrb[0].mxu0
    %393 = vmatprep.mubr.f32.mxu0 0.0
    %394 = vmatmul.mubr.f32.gmra.mrb[0].mxu0 %v122
    %v395 = vpop.f32.mrb[0].mxu0
    %v396 = vadd.f32 %v94, %v395
    %v397 = vpop.f32.mrb[0].mxu0
    %398 = vmatprep.mubr.f32.mxu0 0.0
    %399 = vmatmul.mubr.f32.gmra.mrb[0].mxu0 %v125
    %v400 = vpop.f32.mrb[0].mxu0
    %v401 = vadd.f32 %v94, %v400
    %v402 = vpop.f32.mrb[0].mxu0
    %403 = vmatprep.mubr.f32.mxu0 0.0
    %404 = vmatmul.mubr.f32.gmra.mrb[0].mxu0 %v128
    %v405 = vpop.f32.mrb[0].mxu0
    %v406 = vadd.f32 %v94, %v405
    %v407 = vpop.f32.mrb[0].mxu0
    %408 = vmatprep.mubr.f32.mxu0 0.0
    %409 = vmatmul.mubr.f32.gmra.mrb[0].mxu0 %v131
    %v410 = vpop.f32.mrb[0].mxu0
    %v411 = vadd.f32 %v94, %v410
    %v412 = vpop.f32.mrb[0].mxu0
    %413 = vmatprep.mubr.f32.mxu0 0.0
    %414 = vmatmul.mubr.f32.gmra.mrb[0].mxu0 %v134
    %v415 = vpop.f32.mrb[0].mxu0
    %v416 = vadd.f32 %v94, %v415
    %v417 = vpop.f32.mrb[0].mxu0
    %418 = vmatprep.mubr.f32.mxu0 0.0
    %419 = vmatmul.mubr.f32.gmra.mrb[0].mxu0 %v137
    %v420 = vpop.f32.mrb[0].mxu0
    %v421 = vadd.f32 %v94, %v420
    %v422 = vpop.f32.mrb[0].mxu0
    %423 = vmatprep.mubr.f32.mxu0 0.0
    %424 = vmatmul.mubr.f32.gmra.mrb[0].mxu0 %v140
    %v425 = vpop.f32.mrb[0].mxu0
    %v426 = vadd.f32 %v94, %v425
    %v427 = vpop.f32.mrb[0].mxu0
    %428 = vmatprep.mubr.f32.mxu0 0.0
    %429 = vmatmul.mubr.f32.gmra.mrb[0].mxu0 %v143
    %v430 = vpop.f32.mrb[0].mxu0
    %v431 = vadd.f32 %v94, %v430
    %v432 = vpop.f32.mrb[0].mxu0
    %433 = vmatprep.mubr.f32.mxu0 0.0
    %434 = vmatmul.mubr.f32.gmra.mrb[0].mxu0 %v146
    %v435 = vpop.f32.mrb[0].mxu0
    %v436 = vadd.f32 %v94, %v435
    %v437 = vpop.f32.mrb[0].mxu0
    %438 = vmatprep.mubr.f32.mxu0 0.0
    %439 = vmatmul.mubr.f32.gmra.mrb[0].mxu0 %v149
    %v440 = vpop.f32.mrb[0].mxu0
    %v441 = vadd.f32 %v94, %v440
    %v442 = vpop.f32.mrb[0].mxu0
    %443 = vmatprep.mubr.f32.mxu0 0.0
    %444 = vmatmul.mubr.f32.gmra.mrb[0].mxu0 %v152
    %v445 = vpop.f32.mrb[0].mxu0
    %v446 = vadd.f32 %v94, %v445
    %v447 = vpop.f32.mrb[0].mxu0
    %448 = vmatprep.mubr.f32.mxu0 0.0
    %449 = vmatmul.mubr.f32.gmra.mrb[0].mxu0 %v155
    %v450 = vpop.f32.mrb[0].mxu0
    %v451 = vadd.f32 %v94, %v450
    %v452 = vpop.f32.mrb[0].mxu0
    %453 = vmatprep.mubr.f32.mxu0 0.0
    %454 = vmatmul.mubr.f32.gmra.mrb[0].mxu0 %v158
    %v455 = vpop.f32.mrb[0].mxu0
    %v456 = vadd.f32 %v94, %v455
    %v457 = vpop.f32.mrb[0].mxu0
    %458 = vmatprep.mubr.f32.mxu0 0.0
    %459 = vmatmul.mubr.f32.gmra.mrb[0].mxu0 %v161
    %v460 = vpop.f32.mrb[0].mxu0
    %v461 = vadd.f32 %v94, %v460
    %v462 = vpop.f32.mrb[0].mxu0
    %463 = vmatprep.mubr.f32.mxu0 0.0
    %464 = vmatmul.mubr.f32.gmra.mrb[0].mxu0 %v164
    %v465 = vpop.f32.mrb[0].mxu0
    %v466 = vadd.f32 %v94, %v465
    %v467 = vpop.f32.mrb[0].mxu0
    %468 = vmatprep.mubr.f32.mxu0 0.0
    %469 = vmatmul.mubr.f32.gmra.mrb[0].mxu0 %v167
    %v470 = vpop.f32.mrb[0].mxu0
    %v471 = vadd.f32 %v94, %v470
    %v472 = vpop.f32.mrb[0].mxu0
    %473 = vmatprep.mubr.f32.mxu0 0.0
    %474 = vmatmul.mubr.f32.gmra.mrb[0].mxu0 %v170
    %v475 = vpop.f32.mrb[0].mxu0
    %v476 = vadd.f32 %v94, %v475
    %v477 = vpop.f32.mrb[0].mxu0
    %478 = vmatprep.mubr.f32.mxu0 0.0
    %479 = vmatmul.mubr.f32.gmra.mrb[0].mxu0 %v173
    %v480 = vpop.f32.mrb[0].mxu0
    %v481 = vadd.f32 %v94, %v480
    %v482 = vpop.f32.mrb[0].mxu0
    %483 = vmatprep.mubr.f32.mxu0 0.0
    %484 = vmatmul.mubr.f32.gmra.mrb[0].mxu0 %v176
    %v485 = vpop.f32.mrb[0].mxu0
    %v486 = vadd.f32 %v94, %v485
    %v487 = vpop.f32.mrb[0].mxu0
    %488 = vmatprep.mubr.f32.mxu0 0.0
    %489 = vmatmul.mubr.f32.gmra.mrb[0].mxu0 %v179
    %v490 = vpop.f32.mrb[0].mxu0
    %v491 = vadd.f32 %v94, %v490
    %v492 = vpop.f32.mrb[0].mxu0
    %493 = vmatprep.mubr.f32.mxu0 0.0
    %494 = vmatmul.mubr.f32.gmra.mrb[0].mxu0 %v182
    %v495 = vpop.f32.mrb[0].mxu0
    %v496 = vadd.f32 %v94, %v495
    %v497 = vpop.f32.mrb[0].mxu0
    %498 = vmatprep.mubr.f32.mxu0 0.0
    %499 = vmatmul.mubr.f32.gmra.mrb[0].mxu0 %v185
    %v500 = vpop.f32.mrb[0].mxu0
    %v501 = vadd.f32 %v94, %v500
    %v502 = vpop.f32.mrb[0].mxu0
    %503 = vmatprep.mubr.f32.mxu0 0.0
    %504 = vmatmul.mubr.f32.gmra.mrb[0].mxu0 %v188
    %v505 = vpop.f32.mrb[0].mxu0
    %v506 = vadd.f32 %v94, %v505
    %v507 = vpop.f32.mrb[0].mxu0
    %508 = vmatprep.mubr.f32.mxu0 0.0
    %509 = vmatmul.mubr.f32.gmra.mrb[0].mxu0 %v191
    %v510 = vpop.f32.mrb[0].mxu0
    %v511 = vadd.f32 %v94, %v510
    %v512 = vpop.f32.mrb[0].mxu0
    %513 = vmatprep.mubr.f32.mxu0 0.0
    %514 = vmatmul.mubr.f32.gmra.mrb[0].mxu0 %v194
    %v515 = vpop.f32.mrb[0].mxu0
    %v516 = vadd.f32 %v94, %v515
    %v517 = vpop.f32.mrb[0].mxu0
    %518 = vmatprep.mubr.f32.mxu0 0.0
    %519 = vmatmul.mubr.f32.gmra.mrb[0].mxu0 %v197
    %v520 = vpop.f32.mrb[0].mxu0
    %v521 = vadd.f32 %v94, %v520
    %v522 = vpop.f32.mrb[0].mxu0
    %523 = vmatprep.mubr.f32.mxu0 0.0
    %524 = vmatmul.mubr.f32.gmra.mrb[0].mxu0 %v200
    %v525 = vpop.f32.mrb[0].mxu0
    %v526 = vadd.f32 %v94, %v525
    %v527 = vpop.f32.mrb[0].mxu0
    %528 = vmatprep.mubr.f32.mxu0 0.0
    %529 = vmatmul.mubr.f32.gmra.mrb[0].mxu0 %v203
    %v530 = vpop.f32.mrb[0].mxu0
    %v531 = vadd.f32 %v94, %v530
    %v532 = vpop.f32.mrb[0].mxu0
    %533 = vmatprep.mubr.f32.mxu0 0.0
    %534 = vmatmul.mubr.f32.gmra.mrb[0].mxu0 %v206
    %v535 = vpop.f32.mrb[0].mxu0
    %v536 = vadd.f32 %v94, %v535
    %v537 = vpop.f32.mrb[0].mxu0
    %538 = vmatprep.mubr.f32.mxu0 0.0
    %539 = vmatmul.mubr.f32.gmra.mrb[0].mxu0 %v209
    %v540 = vpop.f32.mrb[0].mxu0
    %v541 = vadd.f32 %v94, %v540
    %v542 = vpop.f32.mrb[0].mxu0
    %543 = vmatprep.mubr.f32.mxu0 0.0
    %544 = vmatmul.mubr.f32.gmra.mrb[0].mxu0 %v212
    %v545 = vpop.f32.mrb[0].mxu0
    %v546 = vadd.f32 %v94, %v545
    %v547 = vpop.f32.mrb[0].mxu0
    %548 = vmatprep.mubr.f32.mxu0 0.0
    %549 = vmatmul.mubr.f32.gmra.mrb[0].mxu0 %v215
    %v550 = vpop.f32.mrb[0].mxu0
    %v551 = vadd.f32 %v94, %v550
    %v552 = vpop.f32.mrb[0].mxu0
    %553 = vmatprep.mubr.f32.mxu0 0.0
    %554 = vmatmul.mubr.f32.gmra.mrb[0].mxu0 %v218
    %v555 = vpop.f32.mrb[0].mxu0
    %v556 = vadd.f32 %v94, %v555
    %v557 = vpop.f32.mrb[0].mxu0
    %558 = vmatprep.mubr.f32.mxu0 0.0
    %559 = vmatmul.mubr.f32.gmra.mrb[0].mxu0 %v221
    %v560 = vpop.f32.mrb[0].mxu0
    %v561 = vadd.f32 %v94, %v560
    %v562 = vpop.f32.mrb[0].mxu0
    %563 = vmatprep.mubr.f32.mxu0 0.0
    %564 = vmatmul.mubr.f32.gmra.mrb[0].mxu0 %v224
    %v565 = vpop.f32.mrb[0].mxu0
    %v566 = vadd.f32 %v94, %v565
    %v567 = vpop.f32.mrb[0].mxu0
    %568 = vmatprep.mubr.f32.mxu0 0.0
    %569 = vmatmul.mubr.f32.gmra.mrb[0].mxu0 %v227
    %v570 = vpop.f32.mrb[0].mxu0
    %v571 = vadd.f32 %v94, %v570
    %v572 = vpop.f32.mrb[0].mxu0
    %573 = vmatprep.mubr.f32.mxu0 0.0
    %574 = vmatmul.mubr.f32.gmra.mrb[0].mxu0 %v230
    %v575 = vpop.f32.mrb[0].mxu0
    %v576 = vadd.f32 %v94, %v575
    %v577 = vpop.f32.mrb[0].mxu0
    %578 = vmatprep.mubr.f32.mxu0 0.0
    %579 = vmatmul.mubr.f32.gmra.mrb[0].mxu0 %v233
    %v580 = vpop.f32.mrb[0].mxu0
    %v581 = vadd.f32 %v94, %v580
    %v582 = vpop.f32.mrb[0].mxu0
    %583 = vmatprep.mubr.f32.mxu0 0.0
    %584 = vmatmul.mubr.f32.gmra.mrb[0].mxu0 %v236
    %v585 = vpop.f32.mrb[0].mxu0
    %v586 = vadd.f32 %v94, %v585
    %v587 = vpop.f32.mrb[0].mxu0
    %588 = vmatprep.mubr.f32.mxu0 0.0
    %589 = vmatmul.mubr.f32.gmra.mrb[0].mxu0 %v239
    %v590 = vpop.f32.mrb[0].mxu0
    %v591 = vadd.f32 %v94, %v590
    %v592 = vpop.f32.mrb[0].mxu0
    %593 = vmatprep.mubr.f32.mxu0 0.0
    %594 = vmatmul.mubr.f32.gmra.mrb[0].mxu0 %v242
    %v595 = vpop.f32.mrb[0].mxu0
    %v596 = vadd.f32 %v94, %v595
    %v597 = vpop.f32.mrb[0].mxu0
    %598 = vmatprep.mubr.f32.mxu0 0.0
    %599 = vmatmul.mubr.f32.gmra.mrb[0].mxu0 %v245
    %v600 = vpop.f32.mrb[0].mxu0
    %v601 = vadd.f32 %v94, %v600
    %v602 = vpop.f32.mrb[0].mxu0
    %603 = vmatprep.mubr.f32.mxu0 0.0
    %604 = vmatmul.mubr.f32.gmra.mrb[0].mxu0 %v248
    %v605 = vpop.f32.mrb[0].mxu0
    %v606 = vadd.f32 %v94, %v605
    %v607 = vpop.f32.mrb[0].mxu0
    %608 = vmatprep.mubr.f32.mxu0 0.0
    %609 = vmatmul.mubr.f32.gmra.mrb[0].mxu0 %v251
    %v610 = vpop.f32.mrb[0].mxu0
    %v611 = vadd.f32 %v94, %v610
    %v612 = vpop.f32.mrb[0].mxu0
    %613 = vmatprep.mubr.f32.mxu0 0.0
    %614 = vmatmul.mubr.f32.gmra.mrb[0].mxu0 %v254
    %v615 = vpop.f32.mrb[0].mxu0
    %v616 = vadd.f32 %v94, %v615
    %v617 = vpop.f32.mrb[0].mxu0
    %618 = vmatprep.mubr.f32.mxu0 0.0
    %619 = vmatmul.mubr.f32.gmra.mrb[0].mxu0 %v257
    %v620 = vpop.f32.mrb[0].mxu0
    %v621 = vadd.f32 %v94, %v620
    %v622 = vpop.f32.mrb[0].mxu0
    %623 = vmatprep.mubr.f32.mxu0 0.0
    %624 = vmatmul.mubr.f32.gmra.mrb[0].mxu0 %v260
    %v625 = vpop.f32.mrb[0].mxu0
    %v626 = vadd.f32 %v94, %v625
    %v627 = vpop.f32.mrb[0].mxu0
    %628 = vmatprep.mubr.f32.mxu0 0.0
    %629 = vmatmul.mubr.f32.gmra.mrb[0].mxu0 %v263
    %v630 = vpop.f32.mrb[0].mxu0
    %v631 = vadd.f32 %v94, %v630
    %v632 = vpop.f32.mrb[0].mxu0
    %633 = vmatprep.mubr.f32.mxu0 0.0
    %634 = vmatmul.mubr.f32.gmra.mrb[0].mxu0 %v266
    %v635 = vpop.f32.mrb[0].mxu0
    %v636 = vadd.f32 %v94, %v635
    %v637 = vpop.f32.mrb[0].mxu0
    %638 = vmatprep.mubr.f32.mxu0 0.0
    %639 = vmatmul.mubr.f32.gmra.mrb[0].mxu0 %v269
    %v640 = vpop.f32.mrb[0].mxu0
    %v641 = vadd.f32 %v94, %v640
    %v642 = vpop.f32.mrb[0].mxu0
    %643 = vmatprep.mubr.f32.mxu0 0.0
    %644 = vmatmul.mubr.f32.gmra.mrb[0].mxu0 %v272
    %v645 = vpop.f32.mrb[0].mxu0
    %v646 = vadd.f32 %v94, %v645
    %v647 = vpop.f32.mrb[0].mxu0
    %648 = vmatprep.mubr.f32.mxu0 0.0
    %649 = vmatmul.mubr.f32.gmra.mrb[0].mxu0 %v275
    %v650 = vpop.f32.mrb[0].mxu0
    %v651 = vadd.f32 %v94, %v650
    %v652 = vpop.f32.mrb[0].mxu0
    %653 = vmatprep.mubr.f32.mxu0 0.0
    %654 = vmatmul.mubr.f32.gmra.mrb[0].mxu0 %v278
    %v655 = vpop.f32.mrb[0].mxu0
    %v656 = vadd.f32 %v94, %v655
    %v657 = vpop.f32.mrb[0].mxu0
    %658 = vmatprep.mubr.f32.mxu0 0.0
    %659 = vmatmul.mubr.f32.gmra.mrb[0].mxu0 %v281
    %v660 = vpop.f32.mrb[0].mxu0
    %v661 = vadd.f32 %v94, %v660
    %v662 = vpop.f32.mrb[0].mxu0
    %663 = vmatprep.mubr.f32.mxu0 0.0
    %664 = vmatmul.mubr.f32.gmra.mrb[0].mxu0 %v284
    %v665 = vpop.f32.mrb[0].mxu0
    %v666 = vadd.f32 %v94, %v665
    %v667 = vpop.f32.mrb[0].mxu0
    %668 = vmatprep.mubr.f32.mxu0 0.0
    %669 = vmatmul.mubr.f32.gmra.mrb[0].mxu0 %v287
    %v670 = vpop.f32.mrb[0].mxu0
    %v671 = vadd.f32 %v94, %v670
    %v672 = vpop.f32.mrb[0].mxu0
    %673 = vdwg.mxu0
    %v674 = vmax.f32 %v356, 0.0
    %v675 = vmax.f32 %v361, 0.0
    %v676 = vmax.f32 %v366, 0.0
    %v677 = vmax.f32 %v371, 0.0
    %v678 = vmax.f32 %v376, 0.0
    %v679 = vmax.f32 %v381, 0.0
    %v680 = vmax.f32 %v386, 0.0
    %v681 = vmax.f32 %v391, 0.0
    %v682 = vmax.f32 %v396, 0.0
    %v683 = vmax.f32 %v401, 0.0
    %v684 = vmax.f32 %v406, 0.0
    %v685 = vmax.f32 %v411, 0.0
    %v686 = vmax.f32 %v416, 0.0
    %v687 = vmax.f32 %v421, 0.0
    %v688 = vmax.f32 %v426, 0.0
    %v689 = vmax.f32 %v431, 0.0
    %v690 = vmax.f32 %v436, 0.0
    %v691 = vmax.f32 %v441, 0.0
    %v692 = vmax.f32 %v446, 0.0
    %v693 = vmax.f32 %v451, 0.0
    %v694 = vmax.f32 %v456, 0.0
    %v695 = vmax.f32 %v461, 0.0
    %v696 = vmax.f32 %v466, 0.0
    %v697 = vmax.f32 %v471, 0.0
    %v698 = vmax.f32 %v476, 0.0
    %v699 = vmax.f32 %v481, 0.0
    %v700 = vmax.f32 %v486, 0.0
    %v701 = vmax.f32 %v491, 0.0
    %v702 = vmax.f32 %v496, 0.0
    %v703 = vmax.f32 %v501, 0.0
    %v704 = vmax.f32 %v506, 0.0
    %v705 = vmax.f32 %v511, 0.0
    %v706 = vmax.f32 %v516, 0.0
    %v707 = vmax.f32 %v521, 0.0
    %v708 = vmax.f32 %v526, 0.0
    %v709 = vmax.f32 %v531, 0.0
    %v710 = vmax.f32 %v536, 0.0
    %v711 = vmax.f32 %v541, 0.0
    %v712 = vmax.f32 %v546, 0.0
    %v713 = vmax.f32 %v551, 0.0
    %v714 = vmax.f32 %v556, 0.0
    %v715 = vmax.f32 %v561, 0.0
    %v716 = vmax.f32 %v566, 0.0
    %v717 = vmax.f32 %v571, 0.0
    %v718 = vmax.f32 %v576, 0.0
    %v719 = vmax.f32 %v581, 0.0
    %v720 = vmax.f32 %v586, 0.0
    %v721 = vmax.f32 %v591, 0.0
    %v722 = vmax.f32 %v596, 0.0
    %v723 = vmax.f32 %v601, 0.0
    %v724 = vmax.f32 %v606, 0.0
    %v725 = vmax.f32 %v611, 0.0
    %v726 = vmax.f32 %v616, 0.0
    %v727 = vmax.f32 %v621, 0.0
    %v728 = vmax.f32 %v626, 0.0
    %v729 = vmax.f32 %v631, 0.0
    %v730 = vmax.f32 %v636, 0.0
    %v731 = vmax.f32 %v641, 0.0
    %v732 = vmax.f32 %v646, 0.0
    %v733 = vmax.f32 %v651, 0.0
    %v734 = vmax.f32 %v656, 0.0
    %v735 = vmax.f32 %v661, 0.0
    %v736 = vmax.f32 %v666, 0.0
    %v737 = vmax.f32 %v671, 0.0
    %v738 = vadd.f32 %v674, %v675
    %v739 = vadd.f32 %v738, %v676
    %v740 = vadd.f32 %v739, %v677
    %v741 = vadd.f32 %v740, %v678
    %v742 = vadd.f32 %v741, %v679
    %v743 = vadd.f32 %v742, %v680
    %v744 = vadd.f32 %v743, %v681
    %v745 = vadd.f32 %v744, %v682
    %v746 = vadd.f32 %v745, %v683
    %v747 = vadd.f32 %v746, %v684
    %v748 = vadd.f32 %v747, %v685
    %v749 = vadd.f32 %v748, %v686
    %v750 = vadd.f32 %v749, %v687
    %v751 = vadd.f32 %v750, %v688
    %v752 = vadd.f32 %v751, %v689
    %v753 = vadd.f32 %v752, %v690
    %v754 = vadd.f32 %v753, %v691
    %v755 = vadd.f32 %v754, %v692
    %v756 = vadd.f32 %v755, %v693
    %v757 = vadd.f32 %v756, %v694
    %v758 = vadd.f32 %v757, %v695
    %v759 = vadd.f32 %v758, %v696
    %v760 = vadd.f32 %v759, %v697
    %v761 = vadd.f32 %v760, %v698
    %v762 = vadd.f32 %v761, %v699
    %v763 = vadd.f32 %v762, %v700
    %v764 = vadd.f32 %v763, %v701
    %v765 = vadd.f32 %v764, %v702
    %v766 = vadd.f32 %v765, %v703
    %v767 = vadd.f32 %v766, %v704
    %v768 = vadd.f32 %v767, %v705
    %v769 = vrot.slane %v768, 4
    %v770 = vadd.f32 %v768, %v769
    %v771 = vrot.slane %v770, 2
    %v772 = vadd.f32 %v770, %v771
    %v773 = vrot.slane %v772, 1
    %v774 = vadd.f32 %v772, %v773
    %v775 = vadd.f32 %v706, %v707
    %v776 = vadd.f32 %v775, %v708
    %v777 = vadd.f32 %v776, %v709
    %v778 = vadd.f32 %v777, %v710
    %v779 = vadd.f32 %v778, %v711
    %v780 = vadd.f32 %v779, %v712
    %v781 = vadd.f32 %v780, %v713
    %v782 = vadd.f32 %v781, %v714
    %v783 = vadd.f32 %v782, %v715
    %v784 = vadd.f32 %v783, %v716
    %v785 = vadd.f32 %v784, %v717
    %v786 = vadd.f32 %v785, %v718
    %v787 = vadd.f32 %v786, %v719
    %v788 = vadd.f32 %v787, %v720
    %v789 = vadd.f32 %v788, %v721
    %v790 = vadd.f32 %v789, %v722
    %v791 = vadd.f32 %v790, %v723
    %v792 = vadd.f32 %v791, %v724
    %v793 = vadd.f32 %v792, %v725
    %v794 = vadd.f32 %v793, %v726
    %v795 = vadd.f32 %v794, %v727
    %v796 = vadd.f32 %v795, %v728
    %v797 = vadd.f32 %v796, %v729
    %v798 = vadd.f32 %v797, %v730
    %v799 = vadd.f32 %v798, %v731
    %v800 = vadd.f32 %v799, %v732
    %v801 = vadd.f32 %v800, %v733
    %v802 = vadd.f32 %v801, %v734
    %v803 = vadd.f32 %v802, %v735
    %v804 = vadd.f32 %v803, %v736
    %v805 = vadd.f32 %v804, %v737
    %v806 = vrot.slane %v805, 4
    %v807 = vadd.f32 %v805, %v806
    %v808 = vrot.slane %v807, 2
    %v809 = vadd.f32 %v807, %v808
    %v810 = vrot.slane %v809, 1
    %v811 = vadd.f32 %v809, %v810
    %v812 = vrcp.pop 256.0
    %v813 = vmul.f32 %v774, %v812
    %v814 = vmul.f32 %v811, %v812
    %v815 = vld [vmem:[%s3] sm:$0xff]
    %v816 = vld [vmem:[%s3 + $0x8] sm:$0xff]
    %v817 = vld [vmem:[%s3 + $0x10] sm:$0xff]
    %v818 = vld [vmem:[%s3 + $0x18] sm:$0xff]
    %v819 = vld [vmem:[%s3 + $0x20] sm:$0xff]
    %v820 = vld [vmem:[%s3 + $0x28] sm:$0xff]
    %v821 = vld [vmem:[%s3 + $0x30] sm:$0xff]
    %v822 = vld [vmem:[%s3 + $0x38] sm:$0xff]
    %v823 = vld [vmem:[%s3 + $0x40] sm:$0xff]
    %v824 = vld [vmem:[%s3 + $0x48] sm:$0xff]
    %v825 = vld [vmem:[%s3 + $0x50] sm:$0xff]
    %v826 = vld [vmem:[%s3 + $0x58] sm:$0xff]
    %v827 = vld [vmem:[%s3 + $0x60] sm:$0xff]
    %v828 = vld [vmem:[%s3 + $0x68] sm:$0xff]
    %v829 = vld [vmem:[%s3 + $0x70] sm:$0xff]
    %v830 = vld [vmem:[%s3 + $0x78] sm:$0xff]
    %v831 = vld [vmem:[%s4] sm:$0x1]
    %v833 = vlaneseq
    %v834 = vshrl.u32 %v833, 7
    %v835 = vsub.s32 0, %v834
    %v836 = vrot.slane %v831, %v835
    %vm840 = vcmask 1041409
    %v841 = vsel %vm840, %v814, %v813
    %843 = vmatprep.subr.mxu0 0.0
    %844 = vmatpush1.msra.mxu0 %v815
    %845 = vmatprep.subr.mxu0 0.0
    %846 = vmatpush1.msra.mxu0 %v816
    %847 = vmatprep.subr.mxu0 0.0
    %848 = vmatpush1.msra.mxu0 %v817
    %849 = vmatprep.subr.mxu0 0.0
    %850 = vmatpush1.msra.mxu0 %v818
    %851 = vmatprep.subr.mxu0 0.0
    %852 = vmatpush1.msra.mxu0 %v819
    %853 = vmatprep.subr.mxu0 0.0
    %854 = vmatpush1.msra.mxu0 %v820
    %855 = vmatprep.subr.mxu0 0.0
    %856 = vmatpush1.msra.mxu0 %v821
    %857 = vmatprep.subr.mxu0 0.0
    %858 = vmatpush1.msra.mxu0 %v822
    %859 = vmatprep.subr.mxu0 0.0
    %860 = vmatpush1.msra.mxu0 %v823
    %861 = vmatprep.subr.mxu0 0.0
    %862 = vmatpush1.msra.mxu0 %v824
    %863 = vmatprep.subr.mxu0 0.0
    %864 = vmatpush1.msra.mxu0 %v825
    %865 = vmatprep.subr.mxu0 0.0
    %866 = vmatpush1.msra.mxu0 %v826
    %867 = vmatprep.subr.mxu0 0.0
    %868 = vmatpush1.msra.mxu0 %v827
    %869 = vmatprep.subr.mxu0 0.0
    %870 = vmatpush1.msra.mxu0 %v828
    %871 = vmatprep.subr.mxu0 0.0
    %872 = vmatpush1.msra.mxu0 %v829
    %873 = vmatprep.subr.mxu0 0.0
    %874 = vmatpush1.msra.mxu0 %v830
    %875 = vmatprep.subr.mxu0 0.0
    %876 = vmatpush1.msra.mxu0 0.0
    %877 = vmatprep.subr.mxu0 0.0
    %878 = vmatpush1.msra.mxu0 0.0
    %879 = vmatprep.subr.mxu0 0.0
    %880 = vmatpush1.msra.mxu0 0.0
    %881 = vmatprep.subr.mxu0 0.0
    %882 = vmatpush1.msra.mxu0 0.0
    %883 = vmatprep.subr.mxu0 0.0
    %884 = vmatpush1.msra.mxu0 0.0
    %885 = vmatprep.subr.mxu0 0.0
    %886 = vmatpush1.msra.mxu0 0.0
    %887 = vmatprep.subr.mxu0 0.0
    %888 = vmatpush1.msra.mxu0 0.0
    %889 = vmatprep.subr.mxu0 0.0
    %890 = vmatpush1.msra.mxu0 0.0
    %891 = vmatprep.subr.mxu0 0.0
    %892 = vmatpush1.msra.mxu0 0.0
    %893 = vmatprep.subr.mxu0 0.0
    %894 = vmatpush1.msra.mxu0 0.0
    %895 = vmatprep.subr.mxu0 0.0
    %896 = vmatpush1.msra.mxu0 0.0
    %897 = vmatprep.subr.mxu0 0.0
    %898 = vmatpush1.msra.mxu0 0.0
    %899 = vmatprep.subr.mxu0 0.0
    %900 = vmatpush1.msra.mxu0 0.0
    %901 = vmatprep.subr.mxu0 0.0
    %902 = vmatpush1.msra.mxu0 0.0
    %903 = vmatprep.subr.mxu0 0.0
    %904 = vmatpush1.msra.mxu0 0.0
    %905 = vmatprep.subr.mxu0 0.0
    %906 = vmatpush1.msra.mxu0 0.0
    %907 = vmatprep.mubr.f32.mxu0 0.0
    %908 = vmatmul.mubr.f32.gmra.mrb[0].mxu0 %v841
    %v909 = vpop.f32.mrb[0].mxu0
    %v910 = vadd.f32 %v836, %v909
    %v911 = vpop.f32.mrb[0].mxu0
    %912 = vdwg.mxu0
    %913 = vst [vmem:[#allocation2] sm:$0x3] %v910
    // Predicated region
    $region22: #{tpu_custom_call.1} parent=1 // pred_check
      _
    $region23: #{tpu_custom_call.1} parent=1 // pred_check_branch
      %915 = sbr.rel (0) target = $region25
    $region24: #{tpu_custom_call.1} parent=1 // pred_region
      %s917 = ssub.s32 32, 32
      %918 = vsyncadd [#allocation3], %s917
      %s920 = sshll.u32 [#allocation2], 4
      %s921 = int_to_ptr.vmem [resolvable:$true] %s920
      %923 = dma.vmem_to_hbm [thread:$0]  %s921, 32, %s5, [#allocation3]
    $region25: #{tpu_custom_call.1} parent=1 // pred_fallthru
      _
    // Predicated region
    $region26: #{tpu_custom_call.1} parent=1 // pred_check
      _
    $region27: #{tpu_custom_call.1} parent=1 // pred_check_branch
      %925 = sbr.rel (0) target = $region29
    $region28: #{tpu_custom_call.1} parent=1 // pred_region
      %926 = dma.done [#allocation3], 32
    $region29: #{tpu_custom_call.1} parent=1 // pred_fallthru
      _
    %927 = vsyncpa [#allocation3], 1

</llo_original>
